<compile_context>
chip_gen: v5e
topology: v5e:2x2
jax: 0.10.0
libtpu: 0.0.40
codegen_flags: <defaults>
</compile_context>

<pallas_src>
import jax
import jax.numpy as jnp
from jax import lax
from jax.experimental import pallas as pl
from jax.experimental.pallas import tpu as pltpu


def _round_up(x, m):
    return ((x + m - 1) // m) * m


def _intermediate_kernel(x_ref, w_ref, b_ref, o_ref):
    # x_ref: (tm, H)   w_ref: (tn, H)   b_ref: (1, tn)   o_ref: (tm, tn)
    x = x_ref[...]
    w = w_ref[...]
    # Contract the hidden dim of both operands (weight kept in [out, in]
    # layout, so no transpose anywhere). Accumulate in f32 on the MXU.
    y = lax.dot_general(
        x, w,
        dimension_numbers=(((1,), (1,)), ((), ())),
        preferred_element_type=jnp.float32,
    )
    y = y + b_ref[...].astype(jnp.float32)
    # Exact GELU (ACT2FN["gelu"]): 0.5 * y * (1 + erf(y / sqrt(2)))
    inv_sqrt2 = jnp.float32(0.7071067811865476)
    act = 0.5 * y * (1.0 + lax.erf(y * inv_sqrt2))
    o_ref[...] = act.astype(o_ref.dtype)


def _choose_tiles(M, H, I, in_itemsize, out_itemsize,
                  vmem_budget_bytes=14 * 1024 * 1024):
    """Pick (tm, tn) so the double-buffered working set fits scoped VMEM."""
    tm = min(512, _round_up(M, 8))
    tn = min(1024, _round_up(I, 128))

    def working_set(tm_, tn_):
        x_b = tm_ * H * in_itemsize
        w_b = tn_ * H * in_itemsize
        b_b = tn_ * 4
        o_b = tm_ * tn_ * out_itemsize
        return 2 * (x_b + w_b + b_b + o_b)  # BlockSpec double-buffers

    while working_set(tm, tn) > vmem_budget_bytes and (tm > 128 or tn > 256):
        if tn >= tm and tn > 256:
            tn //= 2
        elif tm > 128:
            tm //= 2
        else:
            break
    return tm, tn


def elasticbert_intermediate(hidden_states, weight, bias, *, tm=None, tn=None):
    """GELU(hidden_states @ weight.T + bias).

    hidden_states: [B, S, H]; weight: [I, H] (PyTorch Linear layout); bias: [I].
    """
    B, S, H = hidden_states.shape
    I = weight.shape[0]
    M = B * S
    out_dtype = hidden_states.dtype

    in_itemsize = max(jnp.dtype(hidden_states.dtype).itemsize,
                      jnp.dtype(weight.dtype).itemsize)
    out_itemsize = jnp.dtype(out_dtype).itemsize

    tm_auto, tn_auto = _choose_tiles(M, H, I, in_itemsize, out_itemsize)
    if tm is None:
        tm = tm_auto
    if tn is None:
        tn = tn_auto
    tm = min(tm, _round_up(M, 8))
    tn = min(tn, _round_up(I, 128))

    Mp = _round_up(M, tm)
    Ip = _round_up(I, tn)

    x2d = hidden_states.reshape(M, H)
    if Mp != M:
        x2d = jnp.pad(x2d, ((0, Mp - M), (0, 0)))
    w = weight
    b = bias
    if Ip != I:
        w = jnp.pad(w, ((0, Ip - I), (0, 0)))
        b = jnp.pad(b, ((0, Ip - I),))
    b2d = b.reshape(1, Ip)

    grid_m = Mp // tm
    grid_n = Ip // tn

    # HBM input traffic (elements) for the two possible loop orders.
    #  M-outer / N-inner: activations read once, weight read grid_m times.
    #  N-outer / M-inner: weight read once, activations read grid_n times.
    traffic_m_outer = Mp * H + grid_m * Ip * H
    traffic_n_outer = Ip * H + grid_n * Mp * H

    if traffic_n_outer <= traffic_m_outer:
        grid = (grid_n, grid_m)            # weight-resident inner loop
        x_spec = pl.BlockSpec((tm, H), lambda j, i: (i, 0))
        w_spec = pl.BlockSpec((tn, H), lambda j, i: (j, 0))
        b_spec = pl.BlockSpec((1, tn), lambda j, i: (0, j))
        o_spec = pl.BlockSpec((tm, tn), lambda j, i: (i, j))
    else:
        grid = (grid_m, grid_n)            # activation-resident inner loop
        x_spec = pl.BlockSpec((tm, H), lambda i, j: (i, 0))
        w_spec = pl.BlockSpec((tn, H), lambda i, j: (j, 0))
        b_spec = pl.BlockSpec((1, tn), lambda i, j: (0, j))
        o_spec = pl.BlockSpec((tm, tn), lambda i, j: (i, j))

    cost = pl.CostEstimate(
        flops=2 * Mp * H * Ip,
        transcendentals=Mp * Ip,
        bytes_accessed=(min(traffic_m_outer, traffic_n_outer) * in_itemsize
                        + Ip * 4
                        + Mp * Ip * out_itemsize),
    )

    out = pl.pallas_call(
        _intermediate_kernel,
        out_shape=jax.ShapeDtypeStruct((Mp, Ip), out_dtype),
        grid_spec=pltpu.PrefetchScalarGridSpec(
            num_scalar_prefetch=0,
            grid=grid,
            in_specs=[x_spec, w_spec, b_spec],
            out_specs=o_spec,
        ),
        compiler_params=pltpu.CompilerParams(
            dimension_semantics=("parallel", "parallel"),
        ),
        cost_estimate=cost,
    )(x2d, w, b2d)

    if Mp != M or Ip != I:
        out = out[:M, :I]
    return out.reshape(B, S, I)


def _ref_gelu_linear(x, w, b):
    y = x @ w.T + b
    return 0.5 * y * (1.0 + lax.erf(y / jnp.sqrt(2.0)))


if __name__ == "__main__":
    key = jax.random.PRNGKey(0)
    k_x, k_w, k_b = jax.random.split(key, 3)

    # Small config consistent with the module: hidden=32, intermediate=4*hidden.
    batch, seq, hidden_size, intermediate_size = 2, 8, 32, 128
    hidden_states = jax.random.normal(k_x, (batch, seq, hidden_size), dtype=jnp.float32)
    weight = jax.random.normal(k_w, (intermediate_size, hidden_size), dtype=jnp.float32) * 0.02
    bias = jax.random.normal(k_b, (intermediate_size,), dtype=jnp.float32) * 0.02

    out = elasticbert_intermediate(hidden_states, weight, bias)
    out = jax.block_until_ready(out)
    ref = _ref_gelu_linear(hidden_states, weight, bias)
    assert out.shape == (batch, seq, intermediate_size)
    assert jnp.allclose(out, ref, atol=1e-5, rtol=1e-5)

    # Second check: shapes that don't divide the tiles (exercises padding path
    # and the traffic-based grid-order heuristic with grid_n > 1).
    b2, s2, h2, i2 = 3, 5, 32, 200
    x2 = jax.random.normal(k_x, (b2, s2, h2), dtype=jnp.float32)
    w2 = jax.random.normal(k_w, (i2, h2), dtype=jnp.float32) * 0.02
    bb2 = jax.random.normal(k_b, (i2,), dtype=jnp.float32) * 0.02
    out2 = jax.block_until_ready(elasticbert_intermediate(x2, w2, bb2))
    ref2 = _ref_gelu_linear(x2, w2, bb2)
    assert out2.shape == (b2, s2, i2)
    assert jnp.allclose(out2, ref2, atol=1e-5, rtol=1e-5)

    # Third check: many rows with forced small tiles (multi-tile grid on both
    # axes, exercises both loop orders' correctness).
    b3, s3, h3, i3 = 4, 64, 32, 256
    x3 = jax.random.normal(k_x, (b3, s3, h3), dtype=jnp.float32)
    w3 = jax.random.normal(k_w, (i3, h3), dtype=jnp.float32) * 0.02
    bb3 = jax.random.normal(k_b, (i3,), dtype=jnp.float32) * 0.02
    out3 = jax.block_until_ready(
        elasticbert_intermediate(x3, w3, bb3, tm=128, tn=128))
    ref3 = _ref_gelu_linear(x3, w3, bb3)
    assert jnp.allclose(out3, ref3, atol=1e-5, rtol=1e-5)

    print("KERNEL_OK")
</pallas_src>

<mosaic_0001>
module attributes {stable_mosaic.version = 11 : i64} {
  func.func @_intermediate_kernel(%arg0: i32, %arg1: i32, %arg2: memref<16x32xf32, #tpu.memory_space<vmem>>, %arg3: memref<128x32xf32, #tpu.memory_space<vmem>>, %arg4: memref<1x128xf32, #tpu.memory_space<vmem>>, %arg5: memref<16x128xf32, #tpu.memory_space<vmem>>) attributes {dimension_semantics = [#tpu.dimension_semantics<parallel>, #tpu.dimension_semantics<parallel>], iteration_bounds = array<i64: 1, 1>, scalar_prefetch = 0 : i64, scratch_operands = 0 : i64, tpu.core_type = #tpu.core_type<tc>, window_params = [{transform_indices = @transform_0, window_bounds = array<i64: 16, 32>}, {transform_indices = @transform_1, window_bounds = array<i64: 128, 32>}, {transform_indices = @transform_2, window_bounds = array<i64: 1, 128>}, {transform_indices = @transform_3, window_bounds = array<i64: 16, 128>}]} {
    %c0 = arith.constant 0 : index
    %c0_0 = arith.constant 0 : index
    %0 = vector.load %arg2[%c0, %c0_0] : memref<16x32xf32, #tpu.memory_space<vmem>>, vector<16x32xf32>
    %c0_1 = arith.constant 0 : index
    %c0_2 = arith.constant 0 : index
    %1 = vector.load %arg3[%c0_1, %c0_2] : memref<128x32xf32, #tpu.memory_space<vmem>>, vector<128x32xf32>
    %cst = arith.constant dense<0.000000e+00> : vector<16x128xf32>
    %2 = tpu.matmul %0, %1, %cst {dimension_numbers = #tpu.dot_dimension_numbers<[1], [1], [0], [0], [0, 0, 1, 0], [], []>} : vector<16x32xf32>, vector<128x32xf32>, vector<16x128xf32> -> vector<16x128xf32>
    %c0_3 = arith.constant 0 : index
    %c0_4 = arith.constant 0 : index
    %3 = vector.load %arg4[%c0_3, %c0_4] : memref<1x128xf32, #tpu.memory_space<vmem>>, vector<1x128xf32>
    %4 = vector.broadcast %3 : vector<1x128xf32> to vector<16x128xf32>
    %5 = arith.addf %2, %4 : vector<16x128xf32>
    %cst_5 = arith.constant 5.000000e-01 : f32
    %6 = vector.broadcast %cst_5 : f32 to vector<16x128xf32>
    %7 = arith.mulf %6, %5 : vector<16x128xf32>
    %cst_6 = arith.constant 0.707106769 : f32
    %8 = vector.broadcast %cst_6 : f32 to vector<16x128xf32>
    %9 = arith.mulf %5, %8 : vector<16x128xf32>
    %10 = math.erf %9 : vector<16x128xf32>
    %cst_7 = arith.constant 1.000000e+00 : f32
    %11 = vector.broadcast %cst_7 : f32 to vector<16x128xf32>
    %12 = arith.addf %11, %10 : vector<16x128xf32>
    %13 = arith.mulf %7, %12 : vector<16x128xf32>
    %c0_8 = arith.constant 0 : index
    %c0_9 = arith.constant 0 : index
    %14 = vector.load %arg5[%c0_8, %c0_9] : memref<16x128xf32, #tpu.memory_space<vmem>>, vector<16x128xf32>
    tpu.vector_store %arg5[%c0_8, %c0_9], %13 {strides = array<i32>} : memref<16x128xf32, #tpu.memory_space<vmem>>, vector<16x128xf32>,
    return
  }
  func.func @transform_0(%arg0: i32, %arg1: i32) -> (i32, i32) {
    %c0_i32 = arith.constant 0 : i32
    %c0_i32_0 = arith.constant 0 : i32
    return %arg1, %c0_i32 : i32, i32
  }
  func.func @transform_1(%arg0: i32, %arg1: i32) -> (i32, i32) {
    %c0_i32 = arith.constant 0 : i32
    %c0_i32_0 = arith.constant 0 : i32
    return %arg0, %c0_i32 : i32, i32
  }
  func.func @transform_2(%arg0: i32, %arg1: i32) -> (i32, i32) {
    %c0_i32 = arith.constant 0 : i32
    %c0_i32_0 = arith.constant 0 : i32
    return %c0_i32, %arg0 : i32, i32
  }
  func.func @transform_3(%arg0: i32, %arg1: i32) -> (i32, i32) {
    %c0_i32 = arith.constant 0 : i32
    return %arg1, %arg0 : i32, i32
  }
}

</mosaic_0001>

<llo_original>
// kernel: tpu_custom_call.1
$region0: #{tpu_custom_call.1}
  #allocation0 [shape = 'u32[]', space=smem, size = 0x4, offset = 0x4, fixed_abs, tag = 'smem constant byte address 0x4 - core index']
  #allocation1 [shape = 'u32[72,128]{1,0:T(1,128)}', space=vmem, size = 0x9000, scoped, tag = 'internal scratch']
  %s0 = inlined_call_operand.vmem [shape: f32[16,32], index: 0, kind: input, shape index: {}]
  %s1 = inlined_call_operand.vmem [shape: f32[128,32], index: 1, kind: input, shape index: {}]
  %s2 = inlined_call_operand.vmem [shape: f32[1,128], index: 2, kind: input, shape index: {}]
  %s3 = inlined_call_operand.hbm [shape: f32[16,128], index: 3, kind: output, shape index: {}]
  %s4 = sld [smem:[#allocation0]]
  $region22: #{tpu_custom_call.1} parent=0
    _
  %s6 = ssub.s32 1, %s4
  %s7 = scalar_select 0, %s6, %s4
  $region1: #{tpu_custom_call.1} parent=0
    #allocation2 [shape = 'u8[8192]{0}', space=vmem, size = 0x2000, scoped, tag = 'output window, operand 0, single buffered']
    #allocation3 [shape = 's32[1]{0}', space=sflag, size = 0x4, scoped, tag = 'scoped memory for tpu_custom_call.1']
    %8 = vsyncpa [#allocation3], 0
    // Predicated region
    $region2: #{tpu_custom_call.1} parent=1 // pred_check
      _
    $region3: #{tpu_custom_call.1} parent=1 // pred_check_branch
      %10 = sbr.rel (0) target = $region5
    $region4: #{tpu_custom_call.1} parent=1 // pred_region
      _
    $region5: #{tpu_custom_call.1} parent=1 // pred_fallthru
      _
    // Predicated region
    $region6: #{tpu_custom_call.1} parent=1 // pred_check
      _
    $region7: #{tpu_custom_call.1} parent=1 // pred_check_branch
      %12 = sbr.rel (0) target = $region9
    $region8: #{tpu_custom_call.1} parent=1 // pred_region
      _
    $region9: #{tpu_custom_call.1} parent=1 // pred_fallthru
      _
    // Predicated region
    $region10: #{tpu_custom_call.1} parent=1 // pred_check
      _
    $region11: #{tpu_custom_call.1} parent=1 // pred_check_branch
      %14 = sbr.rel (0) target = $region13
    $region12: #{tpu_custom_call.1} parent=1 // pred_region
      _
    $region13: #{tpu_custom_call.1} parent=1 // pred_fallthru
      _
    %v15 = vld [vmem:[%s0] sm:$0xff]
    %v16 = vld [vmem:[%s0 + $0x8] sm:$0xff]
    %v17 = vld [vmem:[%s1] sm:$0xff]
    %v18 = vld [vmem:[%s1 + $0x8] sm:$0xff]
    %v19 = vld [vmem:[%s1 + $0x10] sm:$0xff]
    %v20 = vld [vmem:[%s1 + $0x18] sm:$0xff]
    %v21 = vld [vmem:[%s1 + $0x20] sm:$0xff]
    %v22 = vld [vmem:[%s1 + $0x28] sm:$0xff]
    %v23 = vld [vmem:[%s1 + $0x30] sm:$0xff]
    %v24 = vld [vmem:[%s1 + $0x38] sm:$0xff]
    %v25 = vld [vmem:[%s1 + $0x40] sm:$0xff]
    %v26 = vld [vmem:[%s1 + $0x48] sm:$0xff]
    %v27 = vld [vmem:[%s1 + $0x50] sm:$0xff]
    %v28 = vld [vmem:[%s1 + $0x58] sm:$0xff]
    %v29 = vld [vmem:[%s1 + $0x60] sm:$0xff]
    %v30 = vld [vmem:[%s1 + $0x68] sm:$0xff]
    %v31 = vld [vmem:[%s1 + $0x70] sm:$0xff]
    %v32 = vld [vmem:[%s1 + $0x78] sm:$0xff]
    %v33 = vld [vmem:[%s2] sm:$0x1]
    %v35 = vperm.slane %v33, 0
    %vm37 = vcmask 261120
    %v39 = vsel %vm37, %v15, 0
    %v42 = vsel %vm37, %v16, 0
    %v45 = vsel %vm37, %v17, 0
    %v48 = vsel %vm37, %v18, 0
    %v51 = vsel %vm37, %v19, 0
    %v54 = vsel %vm37, %v20, 0
    %v57 = vsel %vm37, %v21, 0
    %v60 = vsel %vm37, %v22, 0
    %v63 = vsel %vm37, %v23, 0
    %v66 = vsel %vm37, %v24, 0
    %v69 = vsel %vm37, %v25, 0
    %v72 = vsel %vm37, %v26, 0
    %v75 = vsel %vm37, %v27, 0
    %v78 = vsel %vm37, %v28, 0
    %v81 = vsel %vm37, %v29, 0
    %v84 = vsel %vm37, %v30, 0
    %v87 = vsel %vm37, %v31, 0
    %v90 = vsel %vm37, %v32, 0
    %92 = vmatpush.xpose.msra.mxu0 %v90
    %93 = vmatpush.xpose.msra.mxu0 %v87
    %94 = vmatpush.xpose.msra.mxu0 %v84
    %95 = vmatpush.xpose.msra.mxu0 %v81
    %96 = vmatpush.xpose.msra.mxu0 %v78
    %97 = vmatpush.xpose.msra.mxu0 %v75
    %98 = vmatpush.xpose.msra.mxu0 %v72
    %99 = vmatpush.xpose.msra.mxu0 %v69
    %100 = vmatpush.xpose.msra.mxu0 %v66
    %101 = vmatpush.xpose.msra.mxu0 %v63
    %102 = vmatpush.xpose.msra.mxu0 %v60
    %103 = vmatpush.xpose.msra.mxu0 %v57
    %104 = vmatpush.xpose.msra.mxu0 %v54
    %105 = vmatpush.xpose.msra.mxu0 %v51
    %106 = vmatpush.xpose.msra.mxu0 %v48
    %107 = vmatpush.xpose.msra.mxu0 %v45
    %108 = vmatmul.f32.gmra.mxu0 %v39
    %v109 = vpop.f32.mrf.mxu0
    %v110 = vadd.f32 %v35, %v109
    %111 = vmatmul.f32.gmra.mxu0 %v42
    %v112 = vpop.f32.mrf.mxu0
    %v113 = vadd.f32 %v35, %v112
    %114 = vdwg.mxu0
    %v115 = vmul.f32 %v110, 0.5
    %v116 = vmul.f32 %v113, 0.5
    %v117 = vmul.f32 %v110, 0.70710677
    %v118 = vmul.f32 %v113, 0.70710677
    %v119 = vmul.f32 %v117, %v117
    %v120 = vmin.f32 16.0, %v119
    %v121 = vmul.f32 %v120, 2.1237322e-06
    %v122 = vadd.f32 %v121, 0.00028619796
    %v123 = vmul.f32 %v120, %v122
    %v124 = vadd.f32 %v123, 0.0036580483
    %v125 = vmul.f32 %v120, %v124
    %v126 = vadd.f32 %v125, 0.05243302
    %v127 = vmul.f32 %v120, %v126
    %v128 = vadd.f32 %v127, 0.18741608
    %v129 = vmul.f32 %v120, %v128
    %v130 = vadd.f32 %v129, 1.1283791
    %v131 = vmul.f32 %v117, %v130
    %v132 = vmul.f32 %v120, 3.8918573e-05
    %v133 = vadd.f32 %v132, 0.001143296
    %v134 = vmul.f32 %v120, %v133
    %v135 = vadd.f32 %v134, 0.014752088
    %v136 = vmul.f32 %v120, %v135
    %v137 = vadd.f32 %v136, 0.112945676
    %v138 = vmul.f32 %v120, %v137
    %v139 = vadd.f32 %v138, 0.4994258
    %v140 = vmul.f32 %v120, %v139
    %v141 = vadd.f32 %v140, 1.0
    %v142 = vrcp.pop %v141
    %v143 = vmul.f32 %v141, %v142
    %v144 = vsub.f32 1.0, %v143
    %v145 = vmul.f32 %v142, %v144
    %v146 = vadd.f32 %v142, %v145
    %vm147 = vweird.f32 %v141
    %vm148 = vweird.f32 %v142
    %vm149 = vmor %vm147, %vm148
    %v150 = vsel %vm149, %v142, %v146
    %v151 = vand.u32 2147483647, %v141
    %vm152 = vcmp.eq.f32.partialorder %v151, 8.507059e+37
    %v153 = vand.u32 %v141, 2147483648
    %v154 = vor.u32 1.1754944e-38, %v153
    %v155 = vsel %vm152, %v154, %v150
    %v156 = vmul.f32 %v131, %v155
    %v157 = vmin.f32 %v156, 1.0
    %v158 = vmax.f32 %v157, -1.0
    %v159 = vmul.f32 %v118, %v118
    %v160 = vmin.f32 16.0, %v159
    %v161 = vmul.f32 %v160, 2.1237322e-06
    %v162 = vadd.f32 %v161, 0.00028619796
    %v163 = vmul.f32 %v160, %v162
    %v164 = vadd.f32 %v163, 0.0036580483
    %v165 = vmul.f32 %v160, %v164
    %v166 = vadd.f32 %v165, 0.05243302
    %v167 = vmul.f32 %v160, %v166
    %v168 = vadd.f32 %v167, 0.18741608
    %v169 = vmul.f32 %v160, %v168
    %v170 = vadd.f32 %v169, 1.1283791
    %v171 = vmul.f32 %v118, %v170
    %v172 = vmul.f32 %v160, 3.8918573e-05
    %v173 = vadd.f32 %v172, 0.001143296
    %v174 = vmul.f32 %v160, %v173
    %v175 = vadd.f32 %v174, 0.014752088
    %v176 = vmul.f32 %v160, %v175
    %v177 = vadd.f32 %v176, 0.112945676
    %v178 = vmul.f32 %v160, %v177
    %v179 = vadd.f32 %v178, 0.4994258
    %v180 = vmul.f32 %v160, %v179
    %v181 = vadd.f32 %v180, 1.0
    %v182 = vrcp.pop %v181
    %v183 = vmul.f32 %v181, %v182
    %v184 = vsub.f32 1.0, %v183
    %v185 = vmul.f32 %v182, %v184
    %v186 = vadd.f32 %v182, %v185
    %vm187 = vweird.f32 %v181
    %vm188 = vweird.f32 %v182
    %vm189 = vmor %vm187, %vm188
    %v190 = vsel %vm189, %v182, %v186
    %v191 = vand.u32 2147483647, %v181
    %vm192 = vcmp.eq.f32.partialorder %v191, 8.507059e+37
    %v193 = vand.u32 %v181, 2147483648
    %v194 = vor.u32 1.1754944e-38, %v193
    %v195 = vsel %vm192, %v194, %v190
    %v196 = vmul.f32 %v171, %v195
    %v197 = vmin.f32 %v196, 1.0
    %v198 = vmax.f32 %v197, -1.0
    %v199 = vadd.f32 %v158, 1.0
    %v200 = vadd.f32 %v198, 1.0
    %v201 = vmul.f32 %v115, %v199
    %v202 = vmul.f32 %v116, %v200
    %203 = vst [vmem:[#allocation2] sm:$0xff] %v201
    %204 = vst [vmem:[#allocation2 + $0x8] sm:$0xff] %v202
    // Predicated region
    $region14: #{tpu_custom_call.1} parent=1 // pred_check
      _
    $region15: #{tpu_custom_call.1} parent=1 // pred_check_branch
      %206 = sbr.rel (0) target = $region17
    $region16: #{tpu_custom_call.1} parent=1 // pred_region
      %208 = vsyncadd [#allocation3], 0
      %s209 = sshll.u32 [#allocation2], 4
      %s210 = int_to_ptr.vmem [resolvable:$true] %s209
      %s211 = sshll.u32 %s3, 4
      %s212 = int_to_ptr.hbm [resolvable:$true] %s211
      %217 = dma.vmem_to_hbm [thread:$0]  %s210, 256, %s212, [#allocation3], 128, 128, 8
    $region17: #{tpu_custom_call.1} parent=1 // pred_fallthru
      _
    // Predicated region
    $region18: #{tpu_custom_call.1} parent=1 // pred_check
      _
    $region19: #{tpu_custom_call.1} parent=1 // pred_check_branch
      %219 = sbr.rel (0) target = $region21
    $region20: #{tpu_custom_call.1} parent=1 // pred_region
      %221 = dma.done [#allocation3], 256
    $region21: #{tpu_custom_call.1} parent=1 // pred_fallthru
      _
    %222 = vsyncpa [#allocation3], 1

</llo_original>
